<compile_context>
chip_gen: v5e
topology: v5e:2x2
jax: 0.10.0
libtpu: 0.0.40
codegen_flags: <defaults>
</compile_context>

<pallas_src>
import jax
import jax.numpy as jnp
from jax.experimental import pallas as pl
from jax.experimental.pallas import tpu as pltpu

IN_SHAPE = 232
HIDDEN = 64
HIDDEN_PAD = 128   # lane-dense intermediate (padded cols are tanh(0)=0 feeding zero w2 rows)
OUT_SHAPE = 2


def fc_kernel(x_ref, w1_ref, b1_ref, w2_ref, b2_ref, o_ref):
    # Layer 1: cast the f32 x tile to bf16 in VMEM (VPU, hidden under the DMA of the
    # next tile), then (TB, 232) bf16 @ (232, 128) bf16 -> f32 accumulation on the MXU.
    x_bf = x_ref[...].astype(jnp.bfloat16)
    h = jnp.dot(x_bf, w1_ref[...], preferred_element_type=jnp.float32)
    h = jnp.tanh(h + b1_ref[...])
    # Layer 2: bf16 operands (h bounded in [-1,1]), f32 accumulation. (TB,128) @ (128,2).
    y = jnp.dot(h.astype(jnp.bfloat16), w2_ref[...],
                preferred_element_type=jnp.float32)
    o_ref[...] = jnp.tanh(y + b2_ref[...]).astype(o_ref.dtype)


def _round_up(n, m):
    return ((n + m - 1) // m) * m


def fc_forward(x, w1, b1, w2, b2, *, tb=4096, buffers=2):
    """x: (B, IN_SHAPE) f32; w1: (IN_SHAPE, HIDDEN); b1: (1, HIDDEN);
    w2: (HIDDEN, OUT_SHAPE); b2: (1, OUT_SHAPE). Returns (B, OUT_SHAPE) f32."""
    B = x.shape[0]
    x = x.astype(jnp.float32)   # f32 in HBM; bf16 cast happens inside the kernel

    # Batch tile: capped at `tb`, but sized so there are >=2 grid steps when B allows
    # (lets the "parallel" batch axis shard across the two v7x TensorCores).
    TB = max(8, min(tb, _round_up(pl.cdiv(B, 2), 16)))
    grid = (pl.cdiv(B, TB),)   # ragged last block is fine: OOB output stores are masked

    # Zero-pad hidden dim to 128 lanes; resident weights cast to bf16 (tiny, ~60 KB).
    w1_bf = jnp.pad(w1, ((0, 0), (0, HIDDEN_PAD - HIDDEN))).astype(jnp.bfloat16)
    b1p = jnp.pad(b1, ((0, 0), (0, HIDDEN_PAD - HIDDEN))).astype(jnp.float32)
    w2_bf = jnp.pad(w2, ((0, HIDDEN_PAD - HIDDEN), (0, 0))).astype(jnp.bfloat16)
    b2p = b2.astype(jnp.float32)

    # Conservative VMEM estimate: double-buffered f32 x tile + lane-padded f32 out
    # tile, plus resident weights. Only raise the scoped limit when actually needed
    # (e.g. user sweeps tb >= 8192 on v5e's 16 MiB scoped default).
    vmem_est = (2 * (TB * IN_SHAPE * 4 + TB * HIDDEN_PAD * 4)
                + IN_SHAPE * HIDDEN_PAD * 2 + HIDDEN_PAD * 4
                + HIDDEN_PAD * OUT_SHAPE * 2 + OUT_SHAPE * 4)
    compiler_kwargs = dict(dimension_semantics=("parallel",))
    if vmem_est > (14 << 20):
        compiler_kwargs["vmem_limit_bytes"] = min(2 * vmem_est, 100 << 20)

    x_spec_kwargs = {}
    if buffers is not None and buffers != 2:
        x_spec_kwargs["pipeline_mode"] = pl.Buffered(buffers)

    cost = pl.CostEstimate(
        flops=2 * B * (IN_SHAPE * HIDDEN + HIDDEN * OUT_SHAPE),
        transcendentals=B * (HIDDEN + OUT_SHAPE),
        bytes_accessed=(B * IN_SHAPE * 4                 # f32 x read (dominant)
                        + B * OUT_SHAPE * 4              # f32 output write
                        + IN_SHAPE * HIDDEN_PAD * 2      # bf16 w1
                        + HIDDEN_PAD * 4                 # f32 b1
                        + HIDDEN_PAD * OUT_SHAPE * 2     # bf16 w2
                        + OUT_SHAPE * 4),                # f32 b2
    )

    out = pl.pallas_call(
        fc_kernel,
        out_shape=jax.ShapeDtypeStruct((B, OUT_SHAPE), jnp.float32),
        grid_spec=pl.GridSpec(
            grid=grid,
            in_specs=[
                # x: streamed f32 tile per grid step (double-/multi-buffered by Pallas).
                pl.BlockSpec((TB, IN_SHAPE), lambda i: (i, 0), **x_spec_kwargs),
                # Weights/biases: constant block index -> resident in VMEM.
                pl.BlockSpec((IN_SHAPE, HIDDEN_PAD), lambda i: (0, 0)),
                pl.BlockSpec((1, HIDDEN_PAD), lambda i: (0, 0)),
                pl.BlockSpec((HIDDEN_PAD, OUT_SHAPE), lambda i: (0, 0)),
                pl.BlockSpec((1, OUT_SHAPE), lambda i: (0, 0)),
            ],
            out_specs=pl.BlockSpec((TB, OUT_SHAPE), lambda i: (i, 0)),
        ),
        compiler_params=pltpu.CompilerParams(**compiler_kwargs),
        cost_estimate=cost,
    )(x, w1_bf, b1p, w2_bf, b2p)

    return out


def init_params(key):
    # Deterministic init mirroring nn.Linear's uniform(-1/sqrt(fan_in), 1/sqrt(fan_in)).
    k1, k2, k3, k4 = jax.random.split(key, 4)
    bound1 = 1.0 / jnp.sqrt(IN_SHAPE)
    bound2 = 1.0 / jnp.sqrt(HIDDEN)
    w1 = jax.random.uniform(k1, (IN_SHAPE, HIDDEN), jnp.float32, -bound1, bound1)
    b1 = jax.random.uniform(k2, (1, HIDDEN), jnp.float32, -bound1, bound1)
    w2 = jax.random.uniform(k3, (HIDDEN, OUT_SHAPE), jnp.float32, -bound2, bound2)
    b2 = jax.random.uniform(k4, (1, OUT_SHAPE), jnp.float32, -bound2, bound2)
    return w1, b1, w2, b2


def _reference_bf16(x, w1, b1, w2, b2):
    # Mirrors the kernel's bf16 MXU operands with f32 accumulation.
    h = jnp.tanh(jnp.dot(x.astype(jnp.bfloat16), w1.astype(jnp.bfloat16),
                         preferred_element_type=jnp.float32) + b1)
    y = jnp.dot(h.astype(jnp.bfloat16), w2.astype(jnp.bfloat16),
                preferred_element_type=jnp.float32) + b2
    return jnp.tanh(y)


if __name__ == "__main__":
    key = jax.random.PRNGKey(0)
    kx, kp = jax.random.split(key)
    w1, b1, w2, b2 = init_params(kp)

    # Small main test (B=8): single ragged block (TB=16 > B), exercises masked stores.
    B = 8
    x = jax.random.normal(kx, (B, IN_SHAPE), jnp.float32)
    out = jax.block_until_ready(fc_forward(x, w1, b1, w2, b2))
    assert out.shape == (B, OUT_SHAPE)

    ref_bf = _reference_bf16(x, w1, b1, w2, b2)
    assert jnp.allclose(out, ref_bf, atol=2e-3, rtol=2e-3), float(jnp.max(jnp.abs(out - ref_bf)))

    # Full-f32 module semantics; looser tolerance for the bf16 MXU operands.
    ref_f32 = jnp.tanh(jnp.tanh(x @ w1 + b1) @ w2 + b2)
    assert jnp.allclose(out, ref_f32, atol=2e-2)

    # Multi-step grid with B % TB != 0 (no jnp.pad of x; ragged last block).
    B2 = 40
    x2 = jax.random.normal(kx, (B2, IN_SHAPE), jnp.float32)
    out2 = jax.block_until_ready(fc_forward(x2, w1, b1, w2, b2, tb=16))
    assert out2.shape == (B2, OUT_SHAPE)
    ref2 = _reference_bf16(x2, w1, b1, w2, b2)
    assert jnp.allclose(out2, ref2, atol=2e-3, rtol=2e-3), float(jnp.max(jnp.abs(out2 - ref2)))

    print("KERNEL_OK")
</pallas_src>

<mosaic_0001>
module attributes {stable_mosaic.version = 11 : i64} {
  func.func @fc_kernel(%arg0: i32, %arg1: memref<16x232xf32, #tpu.memory_space<vmem>>, %arg2: memref<232x128xbf16, #tpu.memory_space<vmem>>, %arg3: memref<1x128xf32, #tpu.memory_space<vmem>>, %arg4: memref<128x2xbf16, #tpu.memory_space<vmem>>, %arg5: memref<1x2xf32, #tpu.memory_space<vmem>>, %arg6: memref<16x2xf32, #tpu.memory_space<vmem>>) attributes {dimension_semantics = [#tpu.dimension_semantics<parallel>], iteration_bounds = array<i64: 1>, scalar_prefetch = 0 : i64, scratch_operands = 0 : i64, tpu.core_type = #tpu.core_type<tc>, window_params = [{transform_indices = @transform_0, window_bounds = array<i64: 16, 232>}, {pipeline_mode = #tpu.pipeline_mode<synchronous>, transform_indices = @transform_1, window_bounds = array<i64: 232, 128>}, {pipeline_mode = #tpu.pipeline_mode<synchronous>, transform_indices = @transform_2, window_bounds = array<i64: 1, 128>}, {pipeline_mode = #tpu.pipeline_mode<synchronous>, transform_indices = @transform_3, window_bounds = array<i64: 128, 2>}, {pipeline_mode = #tpu.pipeline_mode<synchronous>, transform_indices = @transform_4, window_bounds = array<i64: 1, 2>}, {transform_indices = @transform_5, window_bounds = array<i64: 16, 2>}]} {
    %c0 = arith.constant 0 : index
    %c0_0 = arith.constant 0 : index
    %0 = vector.load %arg1[%c0, %c0_0] : memref<16x232xf32, #tpu.memory_space<vmem>>, vector<16x232xf32>
    %1 = arith.truncf %0 : vector<16x232xf32> to vector<16x232xbf16>
    %c0_1 = arith.constant 0 : index
    %c0_2 = arith.constant 0 : index
    %2 = vector.load %arg2[%c0_1, %c0_2] : memref<232x128xbf16, #tpu.memory_space<vmem>>, vector<232x128xbf16>
    %cst = arith.constant dense<0.000000e+00> : vector<16x128xf32>
    %3 = tpu.matmul %1, %2, %cst {dimension_numbers = #tpu.dot_dimension_numbers<[1], [0], [0], [1], [0, 0, 1, 1], [], []>} : vector<16x232xbf16>, vector<232x128xbf16>, vector<16x128xf32> -> vector<16x128xf32>
    %c0_3 = arith.constant 0 : index
    %c0_4 = arith.constant 0 : index
    %4 = vector.load %arg3[%c0_3, %c0_4] : memref<1x128xf32, #tpu.memory_space<vmem>>, vector<1x128xf32>
    %5 = vector.broadcast %4 : vector<1x128xf32> to vector<16x128xf32>
    %6 = arith.addf %3, %5 : vector<16x128xf32>
    %7 = math.tanh %6 : vector<16x128xf32>
    %8 = arith.truncf %7 : vector<16x128xf32> to vector<16x128xbf16>
    %c0_5 = arith.constant 0 : index
    %c0_6 = arith.constant 0 : index
    %9 = vector.load %arg4[%c0_5, %c0_6] : memref<128x2xbf16, #tpu.memory_space<vmem>>, vector<128x2xbf16>
    %cst_7 = arith.constant dense<0.000000e+00> : vector<16x2xf32>
    %10 = tpu.matmul %8, %9, %cst_7 {dimension_numbers = #tpu.dot_dimension_numbers<[1], [0], [0], [1], [0, 0, 1, 1], [], []>} : vector<16x128xbf16>, vector<128x2xbf16>, vector<16x2xf32> -> vector<16x2xf32>
    %c0_8 = arith.constant 0 : index
    %c0_9 = arith.constant 0 : index
    %11 = vector.load %arg5[%c0_8, %c0_9] : memref<1x2xf32, #tpu.memory_space<vmem>>, vector<1x2xf32>
    %12 = vector.broadcast %11 : vector<1x2xf32> to vector<16x2xf32>
    %13 = arith.addf %10, %12 : vector<16x2xf32>
    %14 = math.tanh %13 : vector<16x2xf32>
    %c0_10 = arith.constant 0 : index
    %c0_11 = arith.constant 0 : index
    %15 = vector.load %arg6[%c0_10, %c0_11] : memref<16x2xf32, #tpu.memory_space<vmem>>, vector<16x2xf32>
    tpu.vector_store %arg6[%c0_10, %c0_11], %14 {strides = array<i32>} : memref<16x2xf32, #tpu.memory_space<vmem>>, vector<16x2xf32>,
    return
  }
  func.func @transform_0(%arg0: i32) -> (i32, i32) {
    %c0_i32 = arith.constant 0 : i32
    %c0_i32_0 = arith.constant 0 : i32
    return %arg0, %c0_i32 : i32, i32
  }
  func.func @transform_1(%arg0: i32) -> (i32, i32) {
    %c0_i32 = arith.constant 0 : i32
    %c0_i32_0 = arith.constant 0 : i32
    %c0_i32_1 = arith.constant 0 : i32
    return %c0_i32, %c0_i32_0 : i32, i32
  }
  func.func @transform_2(%arg0: i32) -> (i32, i32) {
    %c0_i32 = arith.constant 0 : i32
    %c0_i32_0 = arith.constant 0 : i32
    %c0_i32_1 = arith.constant 0 : i32
    return %c0_i32, %c0_i32_0 : i32, i32
  }
  func.func @transform_3(%arg0: i32) -> (i32, i32) {
    %c0_i32 = arith.constant 0 : i32
    %c0_i32_0 = arith.constant 0 : i32
    %c0_i32_1 = arith.constant 0 : i32
    return %c0_i32, %c0_i32_0 : i32, i32
  }
  func.func @transform_4(%arg0: i32) -> (i32, i32) {
    %c0_i32 = arith.constant 0 : i32
    %c0_i32_0 = arith.constant 0 : i32
    %c0_i32_1 = arith.constant 0 : i32
    return %c0_i32, %c0_i32_0 : i32, i32
  }
  func.func @transform_5(%arg0: i32) -> (i32, i32) {
    %c0_i32 = arith.constant 0 : i32
    %c0_i32_0 = arith.constant 0 : i32
    return %arg0, %c0_i32 : i32, i32
  }
}

</mosaic_0001>

<llo_original>
// kernel: tpu_custom_call.1
$region0: #{tpu_custom_call.1}
  #allocation0 [shape = 'u32[]', space=smem, size = 0x4, offset = 0x4, fixed_abs, tag = 'smem constant byte address 0x4 - core index']
  #allocation1 [shape = 'u32[72,128]{1,0:T(1,128)}', space=vmem, size = 0x9000, scoped, tag = 'internal scratch']
  %s0 = inlined_call_operand.vmem [shape: f32[8,232], index: 0, kind: input, shape index: {}]
  %s1 = inlined_call_operand.hbm [shape: bf16[232,128], index: 1, kind: input, shape index: {}]
  %s2 = inlined_call_operand.vmem [shape: f32[1,128], index: 2, kind: input, shape index: {}]
  %s3 = inlined_call_operand.vmem [shape: bf16[128,2], index: 3, kind: input, shape index: {}]
  %s4 = inlined_call_operand.vmem [shape: f32[1,2], index: 4, kind: input, shape index: {}]
  %s5 = inlined_call_operand.vmem [shape: f32[8,2], index: 5, kind: output, shape index: {}]
  %s6 = sld [smem:[#allocation0]]
  $region68: #{tpu_custom_call.1} parent=0
    _
  %s8 = ssub.s32 1, %s6
  %s9 = scalar_select 0, %s8, %s6
  $region1: #{tpu_custom_call.1} parent=0
    #allocation2 [shape = 'u8[59392]{0}', space=vmem, size = 0xe800, scoped, tag = 'input window, operand 1, single buffered']
    #allocation3 [shape = 's32[1]{0}', space=sflag, size = 0x4, scoped, tag = 'scoped memory for tpu_custom_call.1']
    #allocation4 [shape = 'u8[8192]{0}', space=vmem, size = 0x2000, scoped, tag = 'output window, operand 0, single buffered']
    %10 = vsyncpa [#allocation3], 0
    // Predicated region
    $region2: #{tpu_custom_call.1} parent=1 // pred_check
      _
    $region3: #{tpu_custom_call.1} parent=1 // pred_check_branch
      %12 = sbr.rel (0) target = $region5
    $region4: #{tpu_custom_call.1} parent=1 // pred_region
      _
    $region5: #{tpu_custom_call.1} parent=1 // pred_fallthru
      _
    // Predicated region
    $region6: #{tpu_custom_call.1} parent=1 // pred_check
      _
    $region7: #{tpu_custom_call.1} parent=1 // pred_check_branch
      %14 = sbr.rel (0) target = $region9
    $region8: #{tpu_custom_call.1} parent=1 // pred_region
      %16 = vsyncadd [#allocation3], 0
      %s17 = sshll.u32 %s1, 4
      %s18 = int_to_ptr.hbm [resolvable:$true] %s17
      %s19 = sshll.u32 [#allocation2], 4
      %s20 = int_to_ptr.vmem [resolvable:$true] %s19
      %25 = dma.hbm_to_vmem [thread:$0]  %s18, 1856, %s20, [#allocation3], 64, 64, 4
    $region9: #{tpu_custom_call.1} parent=1 // pred_fallthru
      _
    // Predicated region
    $region10: #{tpu_custom_call.1} parent=1 // pred_check
      _
    $region11: #{tpu_custom_call.1} parent=1 // pred_check_branch
      %27 = sbr.rel (0) target = $region13
    $region12: #{tpu_custom_call.1} parent=1 // pred_region
      _
    $region13: #{tpu_custom_call.1} parent=1 // pred_fallthru
      _
    // Predicated region
    $region14: #{tpu_custom_call.1} parent=1 // pred_check
      _
    $region15: #{tpu_custom_call.1} parent=1 // pred_check_branch
      %29 = sbr.rel (0) target = $region17
    $region16: #{tpu_custom_call.1} parent=1 // pred_region
      _
    $region17: #{tpu_custom_call.1} parent=1 // pred_fallthru
      _
    // Predicated region
    $region18: #{tpu_custom_call.1} parent=1 // pred_check
      _
    $region19: #{tpu_custom_call.1} parent=1 // pred_check_branch
      %31 = sbr.rel (0) target = $region21
    $region20: #{tpu_custom_call.1} parent=1 // pred_region
      _
    $region21: #{tpu_custom_call.1} parent=1 // pred_fallthru
      _
    // Predicated region
    $region22: #{tpu_custom_call.1} parent=1 // pred_check
      _
    $region23: #{tpu_custom_call.1} parent=1 // pred_check_branch
      %33 = sbr.rel (0) target = $region25
    $region24: #{tpu_custom_call.1} parent=1 // pred_region
      %35 = dma.done [#allocation3], 1856
    $region25: #{tpu_custom_call.1} parent=1 // pred_fallthru
      _
    %v37 = vld [vmem:[%s0] sm:$0xff]
    %v38 = vld [vmem:[%s0 + $0x8] sm:$0xff]
    %v39 = vld [vmem:[%s0 + $0x10] sm:$0xff]
    %v40 = vld [vmem:[%s0 + $0x18] sm:$0xff]
    %v41 = vpack.c.bf16 %v39, %v37
    %v42 = vpack.c.bf16 %v40, %v38
    %v43 = vld [vmem:[#allocation2] sm:$0xf]
    %v44 = vld [vmem:[#allocation2 + $0x4] sm:$0xf]
    %v45 = vld [vmem:[#allocation2 + $0x8] sm:$0xf]
    %v46 = vld [vmem:[#allocation2 + $0xc] sm:$0xf]
    %v47 = vld [vmem:[#allocation2 + $0x10] sm:$0xf]
    %v48 = vld [vmem:[#allocation2 + $0x14] sm:$0xf]
    %v49 = vld [vmem:[#allocation2 + $0x18] sm:$0xf]
    %v50 = vld [vmem:[#allocation2 + $0x1c] sm:$0xf]
    %v51 = vld [vmem:[#allocation2 + $0x20] sm:$0xf]
    %v52 = vld [vmem:[#allocation2 + $0x24] sm:$0xf]
    %v53 = vld [vmem:[#allocation2 + $0x28] sm:$0xf]
    %v54 = vld [vmem:[#allocation2 + $0x2c] sm:$0xf]
    %v55 = vld [vmem:[#allocation2 + $0x30] sm:$0xf]
    %v56 = vld [vmem:[#allocation2 + $0x34] sm:$0xf]
    %v57 = vld [vmem:[#allocation2 + $0x38] sm:$0xf]
    %v58 = vld [vmem:[#allocation2 + $0x3c] sm:$0xf]
    %v59 = vld [vmem:[#allocation2 + $0x40] sm:$0xf]
    %v60 = vld [vmem:[#allocation2 + $0x44] sm:$0xf]
    %v61 = vld [vmem:[#allocation2 + $0x48] sm:$0xf]
    %v62 = vld [vmem:[#allocation2 + $0x4c] sm:$0xf]
    %v63 = vld [vmem:[#allocation2 + $0x50] sm:$0xf]
    %v64 = vld [vmem:[#allocation2 + $0x54] sm:$0xf]
    %v65 = vld [vmem:[#allocation2 + $0x58] sm:$0xf]
    %v66 = vld [vmem:[#allocation2 + $0x5c] sm:$0xf]
    %v67 = vld [vmem:[#allocation2 + $0x60] sm:$0xf]
    %v68 = vld [vmem:[#allocation2 + $0x64] sm:$0xf]
    %v69 = vld [vmem:[#allocation2 + $0x68] sm:$0xf]
    %v70 = vld [vmem:[#allocation2 + $0x6c] sm:$0xf]
    %v71 = vld [vmem:[#allocation2 + $0x70] sm:$0xf]
    %v72 = vld [vmem:[%s2] sm:$0x1]
    %v74 = vperm.slane %v72, 0
    %v105 = vunpack.c.l.b16 %v43
    %v106 = vunpack.c.l.b16 %v44
    %v107 = vunpack.c.l.b16 %v45
    %v108 = vunpack.c.l.b16 %v46
    %v109 = vunpack.c.l.b16 %v47
    %v110 = vunpack.c.l.b16 %v48
    %v111 = vunpack.c.l.b16 %v49
    %v112 = vunpack.c.l.b16 %v50
    %v113 = vunpack.c.l.b16 %v51
    %v114 = vunpack.c.l.b16 %v52
    %v115 = vunpack.c.l.b16 %v53
    %v116 = vunpack.c.l.b16 %v54
    %v117 = vunpack.c.l.b16 %v55
    %v118 = vunpack.c.l.b16 %v56
    %v119 = vunpack.c.l.b16 %v57
    %v120 = vunpack.c.l.b16 %v58
    %v121 = vunpack.c.l.b16 %v59
    %v122 = vunpack.c.l.b16 %v60
    %v123 = vunpack.c.l.b16 %v61
    %v124 = vunpack.c.l.b16 %v62
    %v125 = vunpack.c.l.b16 %v63
    %v126 = vunpack.c.l.b16 %v64
    %v127 = vunpack.c.l.b16 %v65
    %v128 = vunpack.c.l.b16 %v66
    %v129 = vunpack.c.l.b16 %v67
    %v130 = vunpack.c.l.b16 %v68
    %v131 = vunpack.c.l.b16 %v69
    %v132 = vunpack.c.l.b16 %v70
    %v133 = vunpack.c.l.b16 %v71
    %v134 = vpack.c.b16 %v106, %v105
    %v135 = vpack.c.b16 %v108, %v107
    %v136 = vpack.c.b16 %v110, %v109
    %v137 = vpack.c.b16 %v112, %v111
    %v138 = vpack.c.b16 %v114, %v113
    %v139 = vpack.c.b16 %v116, %v115
    %v140 = vpack.c.b16 %v118, %v117
    %v141 = vpack.c.b16 %v120, %v119
    %v142 = vpack.c.b16 %v122, %v121
    %v143 = vpack.c.b16 %v124, %v123
    %v144 = vpack.c.b16 %v126, %v125
    %v145 = vpack.c.b16 %v128, %v127
    %v146 = vpack.c.b16 %v130, %v129
    %v147 = vpack.c.b16 %v132, %v131
    %v148 = vpack.c.b16 %v133, %v133
    %vm163 = vcmask 850944
    %v165 = vsel %vm163, %v42, 0
    %vm167 = vcmask 1043456
    %v169 = vsel %vm167, %v148, 0
    %171 = vmatpush.bf16.msra.mxu0 %v141
    %172 = vmatpush.bf16.msra.mxu0 %v140
    %173 = vmatpush.bf16.msra.mxu0 %v139
    %174 = vmatpush.bf16.msra.mxu0 %v138
    %175 = vmatpush.bf16.msra.mxu0 %v137
    %176 = vmatpush.bf16.msra.mxu0 %v136
    %177 = vmatpush.bf16.msra.mxu0 %v135
    %178 = vmatpush.bf16.msra.mxu0 %v134
    %179 = vmatmul.bf16.gmra.mxu0 %v41
    %v180 = vpop.f32.mrf.mxu0
    %v181 = vadd.f32 %v74, %v180
    %v182 = vpop.f32.mrf.mxu0
    %v183 = vadd.f32 %v74, %v182
    %184 = vdwg.mxu0
    %185 = vmatpush.bf16.msra.mxu0 0
    %186 = vmatpush.bf16.msra.mxu0 %v169
    %187 = vmatpush.bf16.msra.mxu0 %v147
    %188 = vmatpush.bf16.msra.mxu0 %v146
    %189 = vmatpush.bf16.msra.mxu0 %v145
    %190 = vmatpush.bf16.msra.mxu0 %v144
    %191 = vmatpush.bf16.msra.mxu0 %v143
    %192 = vmatpush.bf16.msra.mxu0 %v142
    %193 = vmatmul.bf16.gmra.mxu0 %v165
    %v194 = vpop.f32.mrf.mxu0
    %v195 = vadd.f32 %v181, %v194
    %v196 = vpop.f32.mrf.mxu0
    %v197 = vadd.f32 %v183, %v196
    %198 = vdwg.mxu0
    %v199 = vtanh.pop %v195
    %v200 = vtanh.pop %v197
    %v201 = vpack.c.bf16 %v200, %v199
    %v202 = vld [vmem:[%s3] sm:$0xf]
    %v203 = vld [vmem:[%s3 + $0x4] sm:$0xf]
    %v204 = vld [vmem:[%s3 + $0x8] sm:$0xf]
    %v205 = vld [vmem:[%s3 + $0xc] sm:$0xf]
    %v206 = vld [vmem:[%s3 + $0x10] sm:$0xf]
    %v207 = vld [vmem:[%s3 + $0x14] sm:$0xf]
    %v208 = vld [vmem:[%s3 + $0x18] sm:$0xf]
    %v209 = vld [vmem:[%s3 + $0x1c] sm:$0xf]
    %v210 = vld [vmem:[%s3 + $0x20] sm:$0xf]
    %v211 = vld [vmem:[%s3 + $0x24] sm:$0xf]
    %v212 = vld [vmem:[%s3 + $0x28] sm:$0xf]
    %v213 = vld [vmem:[%s3 + $0x2c] sm:$0xf]
    %v214 = vld [vmem:[%s3 + $0x30] sm:$0xf]
    %v215 = vld [vmem:[%s3 + $0x34] sm:$0xf]
    %v216 = vld [vmem:[%s3 + $0x38] sm:$0xf]
    %v217 = vld [vmem:[%s3 + $0x3c] sm:$0xf]
    %v218 = vld [vmem:[%s4] sm:$0x1]
    %v220 = vperm.slane %v218, 0
    %v238 = vunpack.c.l.b16 %v202
    %v239 = vunpack.c.l.b16 %v203
    %v240 = vunpack.c.l.b16 %v204
    %v241 = vunpack.c.l.b16 %v205
    %v242 = vunpack.c.l.b16 %v206
    %v243 = vunpack.c.l.b16 %v207
    %v244 = vunpack.c.l.b16 %v208
    %v245 = vunpack.c.l.b16 %v209
    %v246 = vunpack.c.l.b16 %v210
    %v247 = vunpack.c.l.b16 %v211
    %v248 = vunpack.c.l.b16 %v212
    %v249 = vunpack.c.l.b16 %v213
    %v250 = vunpack.c.l.b16 %v214
    %v251 = vunpack.c.l.b16 %v215
    %v252 = vunpack.c.l.b16 %v216
    %v253 = vunpack.c.l.b16 %v217
    %v254 = vpack.c.b16 %v239, %v238
    %v255 = vpack.c.b16 %v241, %v240
    %v256 = vpack.c.b16 %v243, %v242
    %v257 = vpack.c.b16 %v245, %v244
    %v258 = vpack.c.b16 %v247, %v246
    %v259 = vpack.c.b16 %v249, %v248
    %v260 = vpack.c.b16 %v251, %v250
    %v261 = vpack.c.b16 %v253, %v252
    %270 = vmatpush.bf16.msra.mxu0 %v261
    %271 = vmatpush.bf16.msra.mxu0 %v260
    %272 = vmatpush.bf16.msra.mxu0 %v259
    %273 = vmatpush.bf16.msra.mxu0 %v258
    %274 = vmatpush.bf16.msra.mxu0 %v257
    %275 = vmatpush.bf16.msra.mxu0 %v256
    %276 = vmatpush.bf16.msra.mxu0 %v255
    %277 = vmatpush.bf16.msra.mxu0 %v254
    %278 = vmatmul.bf16.gmra.mxu0 %v201
    %v279 = vpop.f32.mrf.mxu0
    %v280 = vadd.f32 %v220, %v279
    %v281 = vpop.f32.mrf.mxu0
    %v282 = vadd.f32 %v220, %v281
    %283 = vdwg.mxu0
    %v284 = vtanh.pop %v280
    %v285 = vtanh.pop %v282
    %vm286 = vcmask 15360
    %287 = vst.msk [vmem:[#allocation4] sm:$0xff] %vm286, %v284
    %288 = vst.msk [vmem:[#allocation4 + $0x8] sm:$0xff] %vm286, %v285
    // Predicated region
    $region26: #{tpu_custom_call.1} parent=1 // pred_check
      _
    $region27: #{tpu_custom_call.1} parent=1 // pred_check_branch
      %290 = sbr.rel (0) target = $region29
    $region28: #{tpu_custom_call.1} parent=1 // pred_region
      // Predicated region
      $region30: #{tpu_custom_call.1} parent=28 // pred_check
        _
      $region31: #{tpu_custom_call.1} parent=28 // pred_check_branch
        %292 = sbr.rel (0) target = $region33
      $region32: #{tpu_custom_call.1} parent=28 // pred_region
        // Predicated region
        $region34: #{tpu_custom_call.1} parent=32 // pred_check
          _
        $region35: #{tpu_custom_call.1} parent=32 // pred_check_branch
          %294 = sbr.rel (0) target = $region37
        $region36: #{tpu_custom_call.1} parent=32 // pred_region
          // Predicated region
          $region49: #{tpu_custom_call.1} parent=36 // pred_check
            _
          $region50: #{tpu_custom_call.1} parent=36 // pred_check_branch
            %310 = sbr.rel (0) target = $region52
          $region51: #{tpu_custom_call.1} parent=36 // pred_region
            loop: start=0, step=1, limit=1
            $region53: #{tpu_custom_call.1} parent=51 // loop_pre_header
              _
            $region54: #{tpu_custom_call.1} parent=51 // loop_header
              %s312 = sphi 0, %s316
              %p313 = scmp.ge.s32.totalorder %s312, 1
              %s317 = sphi [#allocation4], [#allocation4]
              %s318 = sphi %s5, %s5
            $region55: #{tpu_custom_call.1} parent=51 // loop_header_branch
              %315 = sbr.rel (%p313) target = $region59
            $region56: #{tpu_custom_call.1} parent=51 // loop_body
              %v319 = vld [vmem:[%s317] sm:$0xff]
              %320 = vst [vmem:[%s318] sm:$0xff] %v319
            $region57: #{tpu_custom_call.1} parent=51 // loop_footer
              %s316 = sadd.s32 1, %s312
            $region58: #{tpu_custom_call.1} parent=51 // loop_footer_branch
              %311 = sbr.rel target = $region54
            $region59: #{tpu_custom_call.1} parent=51 // loop_exit
              _
          $region52: #{tpu_custom_call.1} parent=36 // pred_fallthru
            _
          // Predicated region
          $region60: #{tpu_custom_call.1} parent=36 // pred_check
            _
          $region61: #{tpu_custom_call.1} parent=36 // pred_check_branch
            %322 = sbr.rel target = $region63
          $region62: #{tpu_custom_call.1} parent=36 // pred_region
            _
          $region63: #{tpu_custom_call.1} parent=36 // pred_fallthru
            _
        $region37: #{tpu_custom_call.1} parent=32 // pred_fallthru
          _
        // Predicated region
        $region38: #{tpu_custom_call.1} parent=32 // pred_check
          _
        $region39: #{tpu_custom_call.1} parent=32 // pred_check_branch
          %296 = sbr.rel target = $region41
        $region40: #{tpu_custom_call.1} parent=32 // pred_region
          %s298 = ssub.s32 256, 1
          loop: start=0, step=1, limit=1
          $region42: #{tpu_custom_call.1} parent=40 // loop_pre_header
            _
          $region43: #{tpu_custom_call.1} parent=40 // loop_header
            %s300 = sphi 0, %s304
            %p301 = scmp.ge.s32.totalorder %s300, 1
            %s305 = sphi [#allocation4], [#allocation4]
            %s306 = sphi %s5, %s5
          $region44: #{tpu_custom_call.1} parent=40 // loop_header_branch
            %303 = sbr.rel (%p301) target = $region48
          $region45: #{tpu_custom_call.1} parent=40 // loop_body
            %v307 = vld [vmem:[%s305] sm:%s298]
            %308 = vst [vmem:[%s306] sm:%s298] %v307
          $region46: #{tpu_custom_call.1} parent=40 // loop_footer
            %s304 = sadd.s32 1, %s300
          $region47: #{tpu_custom_call.1} parent=40 // loop_footer_branch
            %299 = sbr.rel target = $region43
          $region48: #{tpu_custom_call.1} parent=40 // loop_exit
            _
        $region41: #{tpu_custom_call.1} parent=32 // pred_fallthru
          _
      $region33: #{tpu_custom_call.1} parent=28 // pred_fallthru
        _
      %323 = vnop
    $region29: #{tpu_custom_call.1} parent=1 // pred_fallthru
      _
    // Predicated region
    $region64: #{tpu_custom_call.1} parent=1 // pred_check
      _
    $region65: #{tpu_custom_call.1} parent=1 // pred_check_branch
      %325 = sbr.rel (0) target = $region67
    $region66: #{tpu_custom_call.1} parent=1 // pred_region
      _
    $region67: #{tpu_custom_call.1} parent=1 // pred_fallthru
      _
    %326 = vsyncpa [#allocation3], 1

</llo_original>
